<compile_context>
chip_gen: v7x
topology: tpu7x:2x2x1
jax: 0.10.0
libtpu: 0.0.40
codegen_flags: <defaults>
</compile_context>

<pallas_src>
import jax
import jax.numpy as jnp
from jax.experimental import pallas as pl
from jax.experimental.pallas import tpu as pltpu


_TARGET_TILE_BYTES = 4 << 20   # ~4 MiB per tensor per grid step
_VMEM_LIMIT_BYTES = 48 << 20   # explicit limit: > v5e/v6e scoped defaults,
                               # < v7x's 64 MiB physical VMEM (with headroom)


def _li_kernel(x_ref, state_ref, tau_ref, out_ref, state_new_ref):
    x = x_ref[...].astype(jnp.float32)            # (tile_r, tile_c)
    s = state_ref[...].astype(jnp.float32)        # (tile_r, tile_c)
    tau = tau_ref[...].astype(jnp.float32)        # (tile_r, 1) -> lane broadcast
    s_new = s + tau * (x - s)
    state_new_ref[...] = s_new.astype(state_new_ref.dtype)
    out_ref[...] = jnp.clip(s_new, 0.0, 1.0).astype(out_ref.dtype)


def _choose_tiles(rows, cols, itemsize, target_bytes=_TARGET_TILE_BYTES):
    """Pick (tile_r, tile_c) so each block is ~target_bytes.

    Constraints honoured:
      * tile_c is a multiple of 128, or equals the full `cols` extent.
      * tile_r is a multiple of 8, or equals the full `rows` extent.
      * If there is enough work (rows >= 16) we force >= 2 grid steps so the
        pipeline overlaps DMA/compute and v7x's two TensorCores both get work.
    """
    row_bytes = cols * itemsize
    if row_bytes * 8 <= target_bytes or cols <= 128:
        tile_c = cols                              # full extent: always legal
    else:
        # Very wide rows: block columns in multiples of 128 (remainder tile is
        # masked by Pallas, which is correct).
        tile_c = (target_bytes // (8 * itemsize)) // 128 * 128
        tile_c = max(128, min(tile_c, (cols // 128) * 128))

    tile_row_bytes = max(1, tile_c * itemsize)
    tile_r = max(1, target_bytes // tile_row_bytes)
    if tile_r >= rows:
        tile_r = rows                              # full extent: always legal
    else:
        tile_r = min(rows, max(8, (tile_r // 8) * 8))

    steps = pl.cdiv(rows, tile_r) * pl.cdiv(cols, tile_c)
    if steps == 1 and rows >= 16:
        # Split the row axis so there are >= 2 independent tiles.
        tile_r = max(8, ((rows // 2 + 7) // 8) * 8)
    return tile_r, tile_c


def li_forward(x, state, tau):
    """x, state: (N, C, H, W); tau: (C,).

    Returns (clamped_state_new, state_new), both (N, C, H, W).
    NOTE: when called through `li_forward_jit`, x and state are donated and
    must not be reused by the caller after the call.
    """
    N, C, H, W = x.shape
    rows, cols = N * C, H * W

    # Glue: lane-dense 2-D view + per-row tau (one row per (n, c)).
    x2 = x.reshape(rows, cols)
    s2 = state.reshape(rows, cols)
    tau_rows = jnp.tile(tau.astype(x.dtype), (N,)).reshape(rows, 1)

    itemsize = jnp.dtype(x.dtype).itemsize
    tile_r, tile_c = _choose_tiles(rows, cols, itemsize)
    grid = (pl.cdiv(rows, tile_r), pl.cdiv(cols, tile_c))

    out2, s_new2 = pl.pallas_call(
        _li_kernel,
        out_shape=(
            jax.ShapeDtypeStruct((rows, cols), x.dtype),
            jax.ShapeDtypeStruct((rows, cols), x.dtype),
        ),
        grid_spec=pl.GridSpec(
            grid=grid,
            in_specs=[
                pl.BlockSpec((tile_r, tile_c), lambda i, j: (i, j)),
                pl.BlockSpec((tile_r, tile_c), lambda i, j: (i, j)),
                pl.BlockSpec((tile_r, 1), lambda i, j: (i, 0)),
            ],
            out_specs=[
                pl.BlockSpec((tile_r, tile_c), lambda i, j: (i, j)),
                pl.BlockSpec((tile_r, tile_c), lambda i, j: (i, j)),
            ],
        ),
        # x -> out, state -> state_new: no extra HBM output allocations when
        # the caller donates the inputs (see li_forward_jit below).
        input_output_aliases={0: 0, 1: 1},
        compiler_params=pltpu.CompilerParams(
            # Independent tiles on both axes: lets v7x shard across its two
            # TensorCores; neutral on single-TC v5e/v6e.
            dimension_semantics=("parallel", "parallel"),
            vmem_limit_bytes=_VMEM_LIMIT_BYTES,
        ),
    )(x2, s2, tau_rows)

    return out2.reshape(N, C, H, W), s_new2.reshape(N, C, H, W)


# Donation lets XLA honour the in-kernel aliases (otherwise it inserts a
# defensive copy — still correct, but the aliasing saving is lost).
li_forward_jit = jax.jit(li_forward, donate_argnums=(0, 1))


if __name__ == "__main__":
    key = jax.random.PRNGKey(0)
    k_tau, k_x, k_s = jax.random.split(key, 3)

    N, C, H, W = 2, 4, 16, 16
    # Deterministic "parameter init" (mirrors torch.rand(num_channels)).
    tau = jax.random.uniform(k_tau, (C,), dtype=jnp.float32)
    x = jax.random.normal(k_x, (N, C, H, W), dtype=jnp.float32)
    state = jax.random.normal(k_s, (N, C, H, W), dtype=jnp.float32)

    # Reference check in plain JAX, computed BEFORE the kernel call because
    # the jitted kernel donates / aliases the x and state buffers.
    ref_state_new = state + tau.reshape(1, C, 1, 1) * (x - state)
    ref_out = jnp.clip(ref_state_new, 0.0, 1.0)
    jax.block_until_ready((ref_state_new, ref_out))

    out, state_new = li_forward_jit(x, state, tau)
    jax.block_until_ready((out, state_new))

    assert jnp.allclose(state_new, ref_state_new, atol=1e-6)
    assert jnp.allclose(out, ref_out, atol=1e-6)

    print("KERNEL_OK")
</pallas_src>

<mosaic_0001>
module attributes {stable_mosaic.version = 11 : i64} {
  func.func @_li_kernel(%arg0: i32, %arg1: i32, %arg2: memref<8x256xf32, #tpu.memory_space<vmem>>, %arg3: memref<8x256xf32, #tpu.memory_space<vmem>>, %arg4: memref<8x1xf32, #tpu.memory_space<vmem>>, %arg5: memref<8x256xf32, #tpu.memory_space<vmem>>, %arg6: memref<8x256xf32, #tpu.memory_space<vmem>>) attributes {dimension_semantics = [#tpu.dimension_semantics<parallel>, #tpu.dimension_semantics<parallel>], iteration_bounds = array<i64: 1, 1>, scalar_prefetch = 0 : i64, scratch_operands = 0 : i64, tpu.core_type = #tpu.core_type<tc>, window_params = [{transform_indices = @transform_0, window_bounds = array<i64: 8, 256>}, {transform_indices = @transform_1, window_bounds = array<i64: 8, 256>}, {transform_indices = @transform_2, window_bounds = array<i64: 8, 1>}, {transform_indices = @transform_3, window_bounds = array<i64: 8, 256>}, {transform_indices = @transform_4, window_bounds = array<i64: 8, 256>}]} {
    %c0 = arith.constant 0 : index
    %c0_0 = arith.constant 0 : index
    %0 = vector.load %arg2[%c0, %c0_0] : memref<8x256xf32, #tpu.memory_space<vmem>>, vector<8x256xf32>
    %c0_1 = arith.constant 0 : index
    %c0_2 = arith.constant 0 : index
    %1 = vector.load %arg3[%c0_1, %c0_2] : memref<8x256xf32, #tpu.memory_space<vmem>>, vector<8x256xf32>
    %c0_3 = arith.constant 0 : index
    %c0_4 = arith.constant 0 : index
    %2 = vector.load %arg4[%c0_3, %c0_4] : memref<8x1xf32, #tpu.memory_space<vmem>>, vector<8x1xf32>
    %3 = arith.subf %0, %1 : vector<8x256xf32>
    %4 = vector.broadcast %2 : vector<8x1xf32> to vector<8x256xf32>
    %5 = arith.mulf %4, %3 : vector<8x256xf32>
    %6 = arith.addf %1, %5 : vector<8x256xf32>
    %c0_5 = arith.constant 0 : index
    %c0_6 = arith.constant 0 : index
    %7 = vector.load %arg6[%c0_5, %c0_6] : memref<8x256xf32, #tpu.memory_space<vmem>>, vector<8x256xf32>
    tpu.vector_store %arg6[%c0_5, %c0_6], %6 {strides = array<i32>} : memref<8x256xf32, #tpu.memory_space<vmem>>, vector<8x256xf32>,
    %cst = arith.constant 0.000000e+00 : f32
    %cst_7 = arith.constant 1.000000e+00 : f32
    %8 = vector.broadcast %cst : f32 to vector<8x256xf32>
    %9 = arith.maximumf %8, %6 : vector<8x256xf32>
    %10 = vector.broadcast %cst_7 : f32 to vector<8x256xf32>
    %11 = arith.minimumf %10, %9 : vector<8x256xf32>
    %c0_8 = arith.constant 0 : index
    %c0_9 = arith.constant 0 : index
    %12 = vector.load %arg5[%c0_8, %c0_9] : memref<8x256xf32, #tpu.memory_space<vmem>>, vector<8x256xf32>
    tpu.vector_store %arg5[%c0_8, %c0_9], %11 {strides = array<i32>} : memref<8x256xf32, #tpu.memory_space<vmem>>, vector<8x256xf32>,
    return
  }
  func.func @transform_0(%arg0: i32, %arg1: i32) -> (i32, i32) {
    %c0_i32 = arith.constant 0 : i32
    return %arg0, %arg1 : i32, i32
  }
  func.func @transform_1(%arg0: i32, %arg1: i32) -> (i32, i32) {
    %c0_i32 = arith.constant 0 : i32
    return %arg0, %arg1 : i32, i32
  }
  func.func @transform_2(%arg0: i32, %arg1: i32) -> (i32, i32) {
    %c0_i32 = arith.constant 0 : i32
    %c0_i32_0 = arith.constant 0 : i32
    return %arg0, %c0_i32 : i32, i32
  }
  func.func @transform_3(%arg0: i32, %arg1: i32) -> (i32, i32) {
    %c0_i32 = arith.constant 0 : i32
    return %arg0, %arg1 : i32, i32
  }
  func.func @transform_4(%arg0: i32, %arg1: i32) -> (i32, i32) {
    %c0_i32 = arith.constant 0 : i32
    return %arg0, %arg1 : i32, i32
  }
}

</mosaic_0001>

<llo_original>
// kernel: tile.0
$region0: #{tile.0}
  %s0 = inlined_call_operand.vmem [shape: f32[2,4], index: 0, kind: input, shape index: {}]
  %s1 = inlined_call_operand.vmem [shape: f32[8,1], index: 1, kind: output, shape index: {}]
  $region1: #{tile.0} parent=0
    #allocation0 [shape = 'u8[4096]{0}', space=vmem, size = 0x1000, scoped, tag = 'scoped mem for input reshape']
    %s3 = sshllo.u32 0, 2
    %v4 = vld [vmem:[%s0] sm:%s3]
    %5 = vst [vmem:[#allocation0] sm:%s3] %v4
    %v6 = vld [vmem:[#allocation0] sm:$0x3]
    %vm7 = vcmask 7168
    %8 = vst.msk [vmem:[%s1] ss:$4 sm:$0x3] %vm7, %v6
    %v9 = vld [vmem:[#allocation0] sm:$0x3]
    %10 = vrot.lane.b32.xlu0 %v9, 127
    %v11 = vpop.permute.xlu0 %10
    %vm12 = vcmask 7168
    %s13 = scalar_lea.vmem %s1, 1
    %14 = vst.msk [vmem:[%s13] ss:$4 sm:$0x3] %vm12, %v11
    %v15 = vld [vmem:[#allocation0] sm:$0x3]
    %16 = vrot.lane.b32.xlu0 %v15, 126
    %v17 = vpop.permute.xlu0 %16
    %vm18 = vcmask 7168
    %s19 = scalar_lea.vmem %s1, 2
    %20 = vst.msk [vmem:[%s19] ss:$4 sm:$0x3] %vm18, %v17
    %v21 = vld [vmem:[#allocation0] sm:$0x3]
    %22 = vrot.lane.b32.xlu0 %v21, 125
    %v23 = vpop.permute.xlu0 %22
    %vm24 = vcmask 7168
    %s25 = scalar_lea.vmem %s1, 3
    %26 = vst.msk [vmem:[%s25] ss:$4 sm:$0x3] %vm24, %v23

// kernel: tile.8
$region0: #{tile.8}
  #allocation0 [shape = 's32[1]{0}', space=sflag, size = 0x4, scoped, tag = 'scoped memory for tile.8']
  %s0 = inlined_call_operand.vmem [shape: f32[4], index: 0, kind: input, shape index: {}]
  %s1 = inlined_call_operand.vmem [shape: f32[2,4], index: 1, kind: output, shape index: {}]
  // Predicated region
  $region2: #{tile.8} parent=0 // pred_check
    _
  $region3: #{tile.8} parent=0 // pred_check_branch
    %3 = sbr.rel (0) target = $region5
  $region4: #{tile.8} parent=0 // pred_region
    _
  $region5: #{tile.8} parent=0 // pred_fallthru
    _
  %v4 = vld [vmem:[%s0] ss:$0 sm:$0xff]
  %5 = vst [vmem:[%s1] sm:$0x3] %v4

// kernel: li_forward.1
$region0: #{li_forward.1}
  #allocation0 [shape = 'u32[]', space=smem, size = 0x4, offset = 0x4, fixed_abs, tag = 'smem constant byte address 0x4 - core index']
  #allocation1 [shape = 'u32[144,128]{1,0:T(1,128)}', space=vmem, size = 0x12000, scoped, tag = 'internal scratch']
  %s0 = inlined_call_operand.vmem [shape: f32[8,256], index: 0, kind: input, shape index: {}, may-alias: {0,3}]
  %s1 = inlined_call_operand.vmem [shape: f32[8,256], index: 1, kind: input, shape index: {}, may-alias: {1,4}]
  %s2 = inlined_call_operand.vmem [shape: f32[8,1], index: 2, kind: input, shape index: {}]
  %s3 = inlined_call_operand.vmem [shape: f32[8,256], index: 3, kind: output, shape index: {0}, may-alias: {0,3}]
  %s4 = inlined_call_operand.vmem [shape: f32[8,256], index: 4, kind: output, shape index: {1}, may-alias: {1,4}]
  %5 = xla_tuple %s3, %s4
  %s6 = sld [smem:[#allocation0]]
  $region30: #{li_forward.1} parent=0
    _
  %s8 = ssub.s32 1, %s6
  %s9 = scalar_select 0, %s8, %s6
  // Predicated region
  $region2: #{li_forward.1} parent=0 // pred_check
    _
  $region3: #{li_forward.1} parent=0 // pred_check_branch
    %11 = sbr.rel (0) target = $region5
  $region4: #{li_forward.1} parent=0 // pred_region
    _
  $region5: #{li_forward.1} parent=0 // pred_fallthru
    _
  // Predicated region
  $region6: #{li_forward.1} parent=0 // pred_check
    _
  $region7: #{li_forward.1} parent=0 // pred_check_branch
    %13 = sbr.rel (0) target = $region9
  $region8: #{li_forward.1} parent=0 // pred_region
    _
  $region9: #{li_forward.1} parent=0 // pred_fallthru
    _
  // Predicated region
  $region10: #{li_forward.1} parent=0 // pred_check
    _
  $region11: #{li_forward.1} parent=0 // pred_check_branch
    %15 = sbr.rel (0) target = $region13
  $region12: #{li_forward.1} parent=0 // pred_region
    _
  $region13: #{li_forward.1} parent=0 // pred_fallthru
    _
  %v16 = vld [vmem:[%s0] sm:$0xff]
  %v17 = vld [vmem:[%s0 + $0x8] sm:$0xff]
  %v18 = vld [vmem:[%s1] sm:$0xff]
  %v19 = vld [vmem:[%s1 + $0x8] sm:$0xff]
  %v20 = vld [vmem:[%s2] sm:$0xff]
  %v21 = vsub.f32 %v16, %v18
  %v22 = vsub.f32 %v17, %v19
  %24 = vset.pattern.permute.xlu0 0
  %25 = vperm.xlu0 %24, %v20
  %v26 = vpop.permute.xlu0 %25
  %v28 = vmul.f32 %v26, %v21
  %v29 = vmul.f32 %v26, %v22
  %v30 = vadd.f32 %v18, %v28
  %v31 = vadd.f32 %v19, %v29
  %32 = vst [vmem:[%s4] sm:$0xff] %v30
  %33 = vst [vmem:[%s4 + $0x8] sm:$0xff] %v31
  %v34 = vmax.f32 %v30, 0.0
  %v35 = vmax.f32 %v31, 0.0
  %v36 = vmin.f32 %v34, 1.0
  %v37 = vmin.f32 %v35, 1.0
  %38 = vst [vmem:[%s3] sm:$0xff] %v36
  %39 = vst [vmem:[%s3 + $0x8] sm:$0xff] %v37
  // Predicated region
  $region14: #{li_forward.1} parent=0 // pred_check
    _
  $region15: #{li_forward.1} parent=0 // pred_check_branch
    %41 = sbr.rel (0) target = $region17
  $region16: #{li_forward.1} parent=0 // pred_region
    _
  $region17: #{li_forward.1} parent=0 // pred_fallthru
    _
  // Predicated region
  $region18: #{li_forward.1} parent=0 // pred_check
    _
  $region19: #{li_forward.1} parent=0 // pred_check_branch
    %43 = sbr.rel (0) target = $region21
  $region20: #{li_forward.1} parent=0 // pred_region
    _
  $region21: #{li_forward.1} parent=0 // pred_fallthru
    _
  // Predicated region
  $region22: #{li_forward.1} parent=0 // pred_check
    _
  $region23: #{li_forward.1} parent=0 // pred_check_branch
    %45 = sbr.rel (0) target = $region25
  $region24: #{li_forward.1} parent=0 // pred_region
    _
  $region25: #{li_forward.1} parent=0 // pred_fallthru
    _
  // Predicated region
  $region26: #{li_forward.1} parent=0 // pred_check
    _
  $region27: #{li_forward.1} parent=0 // pred_check_branch
    %47 = sbr.rel (0) target = $region29
  $region28: #{li_forward.1} parent=0 // pred_region
    _
  $region29: #{li_forward.1} parent=0 // pred_fallthru
    _

</llo_original>
